<compile_context>
chip_gen: v6e
topology: v6e:2x2x1
jax: 0.10.0
libtpu: 0.0.40
codegen_flags: <defaults>
</compile_context>

<pallas_src>
import jax
import jax.numpy as jnp
from jax import lax
from jax.experimental import pallas as pl
from jax.experimental.pallas import tpu as pltpu

HIDDEN = 30  # nn.Linear(s_dim, 30) / nn.Linear(a_dim, 30) / nn.Linear(30, 1)


def _round_up(x, m):
    return ((x + m - 1) // m) * m


def _cnet_kernel(s_ref, a_ref, ws_ref, wa_ref, b_ref, wo_ref, bo_ref, out_ref):
    # Fused hidden layer: two tiny MXU matmuls into one f32 accumulator
    # (no wrapper-side activation concat / extra HBM pass).
    h = jnp.dot(s_ref[...], ws_ref[...], preferred_element_type=jnp.float32)
    h = h + jnp.dot(a_ref[...], wa_ref[...], preferred_element_type=jnp.float32)
    net = jnp.maximum(h + b_ref[...], 0.0)                        # (TB, H) f32
    # Output layer as an NT contraction: wo (1, H) . net (TB, H) over H
    # -> (1, TB).  Result/store is lane-dense (batch on the lane axis) instead
    # of an N=1 matmul producing a (TB, 1) masked column of vst.msk stores.
    q = lax.dot_general(wo_ref[...], net, (((1,), (1,)), ((), ())),
                        preferred_element_type=jnp.float32)        # (1, TB)
    out_ref[...] = q + bo_ref[...]


def cnet_forward(s, a, params, *, block_b=8192, compute_dtype=jnp.bfloat16,
                 min_pallas_batch=1024, vmem_limit_bytes=48 * 1024 * 1024):
    """q = out(relu(fcs(s) + fca(a))) as one batch-tiled Pallas kernel.

    s: (B, s_dim) f32, a: (B, a_dim) f32 -> (B, 1) f32.
    Activations / input-layer weights are streamed in `compute_dtype`
    (bf16 by default); all accumulation and the output layer are f32.
    """
    ws, bs, wa, ba, wo, bo = params
    B, s_dim = s.shape
    a_dim = a.shape[1]
    hidden = ws.shape[1]

    # Tiny batches: pallas_call launch + DMA setup dominates entirely; let
    # XLA fuse the plain jnp version instead.
    if B < min_pallas_batch:
        return reference_forward(s, a, params)

    act_bytes = jnp.dtype(compute_dtype).itemsize

    s_c = s.astype(compute_dtype)                                   # (B, s_dim)
    a_c = a.astype(compute_dtype)                                   # (B, a_dim)
    ws_c = ws.astype(compute_dtype)                                 # (s_dim, H)
    wa_c = wa.astype(compute_dtype)                                 # (a_dim, H)
    bf = (bs + ba).reshape(1, hidden).astype(jnp.float32)           # (1, H)
    wo_row = wo.reshape(1, hidden).astype(jnp.float32)              # (1, H)
    bo_sc = bo.reshape(1, 1).astype(jnp.float32)                    # (1, 1)

    # ---- batch tile sizing -------------------------------------------------
    # Start from block_b, never exceed the (128-rounded) batch.
    tb = min(block_b, _round_up(B, 128))
    # Keep >=2 grid steps when B allows it, so ("parallel",) can shard the
    # batch across v7x's two TensorCores (harmless on single-TC v5e/v6e).
    tb = min(tb, _round_up(pl.cdiv(B, 2), 128))
    # VMEM-padding model (minor dim pads to 128 lanes): per batch row we hold
    #   2 streamed inputs x 2 buffers x 128 lanes x act_bytes
    # + f32 intermediates (h/net, ~2 live copies) x 128 lanes x 4 B
    # + double-buffered (1, TB) f32 output padded to 8 sublanes.
    per_row_vmem = 2 * 2 * 128 * act_bytes + 2 * 128 * 4 + 2 * 8 * 4
    vmem_rows = (vmem_limit_bytes // 2) // per_row_vmem   # 50% budget headroom
    tb = min(tb, max(128, (vmem_rows // 128) * 128))
    tb = max(128, (tb // 128) * 128)
    grid = (pl.cdiv(B, tb),)

    # Advisory cost hint (uses the actual streaming dtype byte width).
    flops = 2 * B * hidden * (s_dim + a_dim + 1)
    bytes_accessed = (act_bytes * B * (s_dim + a_dim)          # s, a reads
                      + 4 * B                                  # q writes
                      + act_bytes * (s_dim + a_dim) * hidden   # Ws, Wa
                      + 4 * (2 * hidden + 1))                  # biases + wo

    out_row = pl.pallas_call(
        _cnet_kernel,
        out_shape=jax.ShapeDtypeStruct((1, B), jnp.float32),
        grid=grid,
        in_specs=[
            pl.BlockSpec((tb, s_dim), lambda i: (i, 0)),      # s   (streamed)
            pl.BlockSpec((tb, a_dim), lambda i: (i, 0)),      # a   (streamed)
            pl.BlockSpec((s_dim, hidden), lambda i: (0, 0)),  # Ws  (resident)
            pl.BlockSpec((a_dim, hidden), lambda i: (0, 0)),  # Wa  (resident)
            pl.BlockSpec((1, hidden), lambda i: (0, 0)),      # fused bias
            pl.BlockSpec((1, hidden), lambda i: (0, 0)),      # output weight
            pl.BlockSpec((1, 1), lambda i: (0, 0)),           # output bias
        ],
        out_specs=pl.BlockSpec((1, tb), lambda i: (0, i)),    # lane-dense out
        compiler_params=pltpu.CompilerParams(
            dimension_semantics=("parallel",),
            vmem_limit_bytes=vmem_limit_bytes),
        cost_estimate=pl.CostEstimate(
            flops=flops, transcendentals=0, bytes_accessed=bytes_accessed),
    )(s_c, a_c, ws_c, wa_c, bf, wo_row, bo_sc)

    return out_row.reshape(B, 1)  # back to the PyTorch (B, 1) layout


def init_params(key, s_dim, a_dim):
    """Mirrors CNet.__init__: weights ~ N(0, 0.1); biases use the PyTorch
    nn.Linear default U(-1/sqrt(fan_in), +1/sqrt(fan_in))."""
    kws, kwa, kwo, kbs, kba, kbo = jax.random.split(key, 6)
    ws = (0.1 * jax.random.normal(kws, (s_dim, HIDDEN))).astype(jnp.float32)
    wa = (0.1 * jax.random.normal(kwa, (a_dim, HIDDEN))).astype(jnp.float32)
    wo = (0.1 * jax.random.normal(kwo, (HIDDEN, 1))).astype(jnp.float32)
    ls, la, lo = 1.0 / (s_dim ** 0.5), 1.0 / (a_dim ** 0.5), 1.0 / (HIDDEN ** 0.5)
    bs = jax.random.uniform(kbs, (1, HIDDEN), jnp.float32, -ls, ls)
    ba = jax.random.uniform(kba, (1, HIDDEN), jnp.float32, -la, la)
    bo = jax.random.uniform(kbo, (1, 1), jnp.float32, -lo, lo)
    return ws, bs, wa, ba, wo, bo


def reference_forward(s, a, params):
    ws, bs, wa, ba, wo, bo = params
    net = jnp.maximum(s @ ws + bs + a @ wa + ba, 0.0)
    return net @ wo + bo


if __name__ == "__main__":
    key = jax.random.PRNGKey(0)
    k_s, k_a, k_p, k_s2, k_a2 = jax.random.split(key, 5)

    # Small shapes consistent with the module (batch=2, s_dim=8, a_dim=4).
    B, s_dim, a_dim = 2, 8, 4
    s = jax.random.normal(k_s, (B, s_dim), dtype=jnp.float32)
    a = jax.random.normal(k_a, (B, a_dim), dtype=jnp.float32)
    params = init_params(k_p, s_dim, a_dim)

    # Tiny batch, forced through the Pallas path in f32: exact match.
    q = cnet_forward(s, a, params, compute_dtype=jnp.float32, min_pallas_batch=0)
    jax.block_until_ready(q)
    q_ref = reference_forward(s, a, params)
    assert q.shape == (B, 1)
    assert jnp.allclose(q, q_ref, atol=1e-5, rtol=1e-5)

    # Batch-tiled grid path (multi-step + partial last block), default bf16
    # streaming (looser tolerance vs the f32 reference).
    B2 = 300
    s2 = jax.random.normal(k_s2, (B2, s_dim), dtype=jnp.float32)
    a2 = jax.random.normal(k_a2, (B2, a_dim), dtype=jnp.float32)
    q2 = cnet_forward(s2, a2, params, min_pallas_batch=0)
    jax.block_until_ready(q2)
    q2_ref = reference_forward(s2, a2, params)
    assert q2.shape == (B2, 1)
    assert jnp.allclose(q2, q2_ref, atol=5e-2, rtol=5e-2)

    # Same multi-step path in f32 for a tight numerical check.
    q3 = cnet_forward(s2, a2, params, compute_dtype=jnp.float32,
                      min_pallas_batch=0)
    jax.block_until_ready(q3)
    assert jnp.allclose(q3, q2_ref, atol=1e-5, rtol=1e-5)

    print("KERNEL_OK")
</pallas_src>

<mosaic_0001>
module attributes {stable_mosaic.version = 11 : i64} {
  func.func @_cnet_kernel(%arg0: i32, %arg1: memref<128x8xf32, #tpu.memory_space<vmem>>, %arg2: memref<128x4xf32, #tpu.memory_space<vmem>>, %arg3: memref<8x30xf32, #tpu.memory_space<vmem>>, %arg4: memref<4x30xf32, #tpu.memory_space<vmem>>, %arg5: memref<1x30xf32, #tpu.memory_space<vmem>>, %arg6: memref<1x30xf32, #tpu.memory_space<vmem>>, %arg7: memref<1x1xf32, #tpu.memory_space<vmem>>, %arg8: memref<1x128xf32, #tpu.memory_space<vmem>>) attributes {dimension_semantics = [#tpu.dimension_semantics<parallel>], iteration_bounds = array<i64: 1>, scalar_prefetch = 0 : i64, scratch_operands = 0 : i64, tpu.core_type = #tpu.core_type<tc>, window_params = [{transform_indices = @transform_0, window_bounds = array<i64: 128, 8>}, {transform_indices = @transform_1, window_bounds = array<i64: 128, 4>}, {pipeline_mode = #tpu.pipeline_mode<synchronous>, transform_indices = @transform_2, window_bounds = array<i64: 8, 30>}, {pipeline_mode = #tpu.pipeline_mode<synchronous>, transform_indices = @transform_3, window_bounds = array<i64: 4, 30>}, {pipeline_mode = #tpu.pipeline_mode<synchronous>, transform_indices = @transform_4, window_bounds = array<i64: 1, 30>}, {pipeline_mode = #tpu.pipeline_mode<synchronous>, transform_indices = @transform_5, window_bounds = array<i64: 1, 30>}, {pipeline_mode = #tpu.pipeline_mode<synchronous>, transform_indices = @transform_6, window_bounds = array<i64: 1, 1>}, {transform_indices = @transform_7, window_bounds = array<i64: 1, 128>}]} {
    %c0 = arith.constant 0 : index
    %c0_0 = arith.constant 0 : index
    %0 = vector.load %arg1[%c0, %c0_0] : memref<128x8xf32, #tpu.memory_space<vmem>>, vector<128x8xf32>
    %c0_1 = arith.constant 0 : index
    %c0_2 = arith.constant 0 : index
    %1 = vector.load %arg3[%c0_1, %c0_2] : memref<8x30xf32, #tpu.memory_space<vmem>>, vector<8x30xf32>
    %cst = arith.constant dense<0.000000e+00> : vector<128x30xf32>
    %2 = tpu.matmul %0, %1, %cst {dimension_numbers = #tpu.dot_dimension_numbers<[1], [0], [0], [1], [0, 0, 1, 1], [], []>} : vector<128x8xf32>, vector<8x30xf32>, vector<128x30xf32> -> vector<128x30xf32>
    %c0_3 = arith.constant 0 : index
    %c0_4 = arith.constant 0 : index
    %3 = vector.load %arg2[%c0_3, %c0_4] : memref<128x4xf32, #tpu.memory_space<vmem>>, vector<128x4xf32>
    %c0_5 = arith.constant 0 : index
    %c0_6 = arith.constant 0 : index
    %4 = vector.load %arg4[%c0_5, %c0_6] : memref<4x30xf32, #tpu.memory_space<vmem>>, vector<4x30xf32>
    %cst_7 = arith.constant dense<0.000000e+00> : vector<128x30xf32>
    %5 = tpu.matmul %3, %4, %cst_7 {dimension_numbers = #tpu.dot_dimension_numbers<[1], [0], [0], [1], [0, 0, 1, 1], [], []>} : vector<128x4xf32>, vector<4x30xf32>, vector<128x30xf32> -> vector<128x30xf32>
    %6 = arith.addf %2, %5 : vector<128x30xf32>
    %c0_8 = arith.constant 0 : index
    %c0_9 = arith.constant 0 : index
    %7 = vector.load %arg5[%c0_8, %c0_9] : memref<1x30xf32, #tpu.memory_space<vmem>>, vector<1x30xf32>
    %8 = vector.broadcast %7 : vector<1x30xf32> to vector<128x30xf32>
    %9 = arith.addf %6, %8 : vector<128x30xf32>
    %cst_10 = arith.constant 0.000000e+00 : f32
    %10 = vector.broadcast %cst_10 : f32 to vector<128x30xf32>
    %11 = arith.maximumf %9, %10 : vector<128x30xf32>
    %c0_11 = arith.constant 0 : index
    %c0_12 = arith.constant 0 : index
    %12 = vector.load %arg6[%c0_11, %c0_12] : memref<1x30xf32, #tpu.memory_space<vmem>>, vector<1x30xf32>
    %cst_13 = arith.constant dense<0.000000e+00> : vector<1x128xf32>
    %13 = tpu.matmul %12, %11, %cst_13 {dimension_numbers = #tpu.dot_dimension_numbers<[1], [1], [0], [0], [0, 0, 1, 0], [], []>} : vector<1x30xf32>, vector<128x30xf32>, vector<1x128xf32> -> vector<1x128xf32>
    %c0_14 = arith.constant 0 : index
    %c0_15 = arith.constant 0 : index
    %14 = vector.load %arg7[%c0_14, %c0_15] : memref<1x1xf32, #tpu.memory_space<vmem>>, vector<1x1xf32>
    %15 = vector.broadcast %14 : vector<1x1xf32> to vector<1x128xf32>
    %16 = arith.addf %13, %15 : vector<1x128xf32>
    %c0_16 = arith.constant 0 : index
    %c0_17 = arith.constant 0 : index
    %17 = vector.load %arg8[%c0_16, %c0_17] : memref<1x128xf32, #tpu.memory_space<vmem>>, vector<1x128xf32>
    tpu.vector_store %arg8[%c0_16, %c0_17], %16 {strides = array<i32>} : memref<1x128xf32, #tpu.memory_space<vmem>>, vector<1x128xf32>,
    return
  }
  func.func @transform_0(%arg0: i32) -> (i32, i32) {
    %c0_i32 = arith.constant 0 : i32
    %c0_i32_0 = arith.constant 0 : i32
    return %arg0, %c0_i32 : i32, i32
  }
  func.func @transform_1(%arg0: i32) -> (i32, i32) {
    %c0_i32 = arith.constant 0 : i32
    %c0_i32_0 = arith.constant 0 : i32
    return %arg0, %c0_i32 : i32, i32
  }
  func.func @transform_2(%arg0: i32) -> (i32, i32) {
    %c0_i32 = arith.constant 0 : i32
    %c0_i32_0 = arith.constant 0 : i32
    %c0_i32_1 = arith.constant 0 : i32
    return %c0_i32, %c0_i32_0 : i32, i32
  }
  func.func @transform_3(%arg0: i32) -> (i32, i32) {
    %c0_i32 = arith.constant 0 : i32
    %c0_i32_0 = arith.constant 0 : i32
    %c0_i32_1 = arith.constant 0 : i32
    return %c0_i32, %c0_i32_0 : i32, i32
  }
  func.func @transform_4(%arg0: i32) -> (i32, i32) {
    %c0_i32 = arith.constant 0 : i32
    %c0_i32_0 = arith.constant 0 : i32
    %c0_i32_1 = arith.constant 0 : i32
    return %c0_i32, %c0_i32_0 : i32, i32
  }
  func.func @transform_5(%arg0: i32) -> (i32, i32) {
    %c0_i32 = arith.constant 0 : i32
    %c0_i32_0 = arith.constant 0 : i32
    %c0_i32_1 = arith.constant 0 : i32
    return %c0_i32, %c0_i32_0 : i32, i32
  }
  func.func @transform_6(%arg0: i32) -> (i32, i32) {
    %c0_i32 = arith.constant 0 : i32
    %c0_i32_0 = arith.constant 0 : i32
    %c0_i32_1 = arith.constant 0 : i32
    return %c0_i32, %c0_i32_0 : i32, i32
  }
  func.func @transform_7(%arg0: i32) -> (i32, i32) {
    %c0_i32 = arith.constant 0 : i32
    %c0_i32_0 = arith.constant 0 : i32
    return %c0_i32, %arg0 : i32, i32
  }
}

</mosaic_0001>

<llo_original>
// kernel: tpu_custom_call.1
$region0: #{tpu_custom_call.1}
  #allocation0 [shape = 'u32[]', space=smem, size = 0x4, offset = 0x4, fixed_abs, tag = 'smem constant byte address 0x4 - core index']
  #allocation1 [shape = 'u32[144,128]{1,0:T(1,128)}', space=vmem, size = 0x12000, scoped, tag = 'internal scratch']
  #allocation2 [shape = 'f32[1,1]{1,0:T(1,128)S(1)}', space=vmem, size = 0x200, scoped, tag = 'scoped memory for tpu_custom_call.1']
  %s0 = inlined_call_operand.vmem [shape: f32[2,8], index: 0, kind: input, shape index: {}]
  %s1 = inlined_call_operand.hbm [shape: f32[2,4], index: 1, kind: input, shape index: {}]
  %s2 = inlined_call_operand.hbm [shape: f32[8,30], index: 2, kind: input, shape index: {}]
  %s3 = inlined_call_operand.vmem [shape: f32[4,30], index: 3, kind: input, shape index: {}]
  %s4 = inlined_call_operand.vmem [shape: f32[1,30], index: 4, kind: input, shape index: {}]
  %s5 = inlined_call_operand.vmem [shape: f32[1,30], index: 5, kind: input, shape index: {}]
  %s6 = inlined_call_operand.<no memory space> [shape: f32[1,1], index: 6, kind: input, shape index: {}]
  %s7 = inlined_call_operand.hbm [shape: f32[1,2], index: 7, kind: output, shape index: {}]
  %s8 = sld [smem:[#allocation0]]
  $region46: #{tpu_custom_call.1} parent=0
    _
  %s10 = ssub.s32 1, %s8
  %s11 = scalar_select 0, %s10, %s8
  %v12 = vstv %s6
  %13 = vst [vmem:[#allocation2] sm:$0x1] %v12
  $region1: #{tpu_custom_call.1} parent=0
    #allocation3 [shape = 'u8[65536]{0}', space=vmem, size = 0x10000, scoped, tag = 'input window, operand 1, single buffered']
    #allocation4 [shape = 's32[1]{0}', space=sflag, size = 0x4, scoped, tag = 'scoped memory for tpu_custom_call.1']
    #allocation5 [shape = 's32[1]{0}', space=sflag, size = 0x4, scoped, tag = 'scoped memory for tpu_custom_call.1']
    #allocation6 [shape = 'u8[4096]{0}', space=vmem, size = 0x1000, scoped, tag = 'input window, operand 2, single buffered']
    #allocation7 [shape = 's32[1]{0}', space=sflag, size = 0x4, scoped, tag = 'scoped memory for tpu_custom_call.1']
    #allocation8 [shape = 'u8[512]{0}', space=vmem, size = 0x400, scoped, tag = 'output window, operand 0, single buffered']
    %14 = vsyncpa [#allocation4], 0
    %15 = vsyncpa [#allocation7], 0
    %16 = vsyncpa [#allocation5], 0
    // Predicated region
    $region2: #{tpu_custom_call.1} parent=1 // pred_check
      _
    $region3: #{tpu_custom_call.1} parent=1 // pred_check_branch
      %18 = sbr.rel (0) target = $region5
    $region4: #{tpu_custom_call.1} parent=1 // pred_region
      _
    $region5: #{tpu_custom_call.1} parent=1 // pred_fallthru
      _
    // Predicated region
    $region6: #{tpu_custom_call.1} parent=1 // pred_check
      _
    $region7: #{tpu_custom_call.1} parent=1 // pred_check_branch
      %20 = sbr.rel (0) target = $region9
    $region8: #{tpu_custom_call.1} parent=1 // pred_region
      %s22 = ssub.s32 2048, 32
      %23 = vsyncadd [#allocation4], %s22
      %s24 = sshll.u32 [#allocation3], 4
      %s25 = int_to_ptr.vmem [resolvable:$true] %s24
      %30 = dma.hbm_to_vmem [thread:$0]  %s1, 32, %s25, [#allocation4], 32, 32, 2
    $region9: #{tpu_custom_call.1} parent=1 // pred_fallthru
      _
    // Predicated region
    $region10: #{tpu_custom_call.1} parent=1 // pred_check
      _
    $region11: #{tpu_custom_call.1} parent=1 // pred_check_branch
      %32 = sbr.rel (0) target = $region13
    $region12: #{tpu_custom_call.1} parent=1 // pred_region
      %s34 = ssub.s32 128, 128
      %35 = vsyncadd [#allocation7], %s34
      %s37 = sshll.u32 [#allocation6], 4
      %s38 = int_to_ptr.vmem [resolvable:$true] %s37
      %40 = dma.hbm_to_vmem [thread:$0]  %s2, 128, %s38, [#allocation7]
    $region13: #{tpu_custom_call.1} parent=1 // pred_fallthru
      _
    // Predicated region
    $region14: #{tpu_custom_call.1} parent=1 // pred_check
      _
    $region15: #{tpu_custom_call.1} parent=1 // pred_check_branch
      %42 = sbr.rel (0) target = $region17
    $region16: #{tpu_custom_call.1} parent=1 // pred_region
      _
    $region17: #{tpu_custom_call.1} parent=1 // pred_fallthru
      _
    // Predicated region
    $region18: #{tpu_custom_call.1} parent=1 // pred_check
      _
    $region19: #{tpu_custom_call.1} parent=1 // pred_check_branch
      %44 = sbr.rel (0) target = $region21
    $region20: #{tpu_custom_call.1} parent=1 // pred_region
      _
    $region21: #{tpu_custom_call.1} parent=1 // pred_fallthru
      _
    // Predicated region
    $region22: #{tpu_custom_call.1} parent=1 // pred_check
      _
    $region23: #{tpu_custom_call.1} parent=1 // pred_check_branch
      %46 = sbr.rel (0) target = $region25
    $region24: #{tpu_custom_call.1} parent=1 // pred_region
      _
    $region25: #{tpu_custom_call.1} parent=1 // pred_fallthru
      _
    // Predicated region
    $region26: #{tpu_custom_call.1} parent=1 // pred_check
      _
    $region27: #{tpu_custom_call.1} parent=1 // pred_check_branch
      %48 = sbr.rel (0) target = $region29
    $region28: #{tpu_custom_call.1} parent=1 // pred_region
      _
    $region29: #{tpu_custom_call.1} parent=1 // pred_fallthru
      _
    // Predicated region
    $region30: #{tpu_custom_call.1} parent=1 // pred_check
      _
    $region31: #{tpu_custom_call.1} parent=1 // pred_check_branch
      %50 = sbr.rel (0) target = $region33
    $region32: #{tpu_custom_call.1} parent=1 // pred_region
      %51 = dma.done [#allocation4], 2048
    $region33: #{tpu_custom_call.1} parent=1 // pred_fallthru
      _
    // Predicated region
    $region34: #{tpu_custom_call.1} parent=1 // pred_check
      _
    $region35: #{tpu_custom_call.1} parent=1 // pred_check_branch
      %53 = sbr.rel (0) target = $region37
    $region36: #{tpu_custom_call.1} parent=1 // pred_region
      %54 = dma.done [#allocation7], 128
    $region37: #{tpu_custom_call.1} parent=1 // pred_fallthru
      _
    %v55 = vld [vmem:[%s0] sm:$0xff]
    %v56 = vld [vmem:[%s0 + $0x8] sm:$0xff]
    %v57 = vld [vmem:[%s0 + $0x10] sm:$0xff]
    %v58 = vld [vmem:[%s0 + $0x18] sm:$0xff]
    %v59 = vld [vmem:[%s0 + $0x20] sm:$0xff]
    %v60 = vld [vmem:[%s0 + $0x28] sm:$0xff]
    %v61 = vld [vmem:[%s0 + $0x30] sm:$0xff]
    %v62 = vld [vmem:[%s0 + $0x38] sm:$0xff]
    %v63 = vld [vmem:[%s0 + $0x40] sm:$0xff]
    %v64 = vld [vmem:[%s0 + $0x48] sm:$0xff]
    %v65 = vld [vmem:[%s0 + $0x50] sm:$0xff]
    %v66 = vld [vmem:[%s0 + $0x58] sm:$0xff]
    %v67 = vld [vmem:[%s0 + $0x60] sm:$0xff]
    %v68 = vld [vmem:[%s0 + $0x68] sm:$0xff]
    %v69 = vld [vmem:[%s0 + $0x70] sm:$0xff]
    %v70 = vld [vmem:[%s0 + $0x78] sm:$0xff]
    %v71 = vld [vmem:[#allocation6] sm:$0xff]
    %v72 = vld [vmem:[#allocation3] sm:$0xff]
    %v73 = vld [vmem:[#allocation3 + $0x8] sm:$0xff]
    %v74 = vld [vmem:[#allocation3 + $0x10] sm:$0xff]
    %v75 = vld [vmem:[#allocation3 + $0x18] sm:$0xff]
    %v76 = vld [vmem:[#allocation3 + $0x20] sm:$0xff]
    %v77 = vld [vmem:[#allocation3 + $0x28] sm:$0xff]
    %v78 = vld [vmem:[#allocation3 + $0x30] sm:$0xff]
    %v79 = vld [vmem:[#allocation3 + $0x38] sm:$0xff]
    %v80 = vld [vmem:[#allocation3 + $0x40] sm:$0xff]
    %v81 = vld [vmem:[#allocation3 + $0x48] sm:$0xff]
    %v82 = vld [vmem:[#allocation3 + $0x50] sm:$0xff]
    %v83 = vld [vmem:[#allocation3 + $0x58] sm:$0xff]
    %v84 = vld [vmem:[#allocation3 + $0x60] sm:$0xff]
    %v85 = vld [vmem:[#allocation3 + $0x68] sm:$0xff]
    %v86 = vld [vmem:[#allocation3 + $0x70] sm:$0xff]
    %v87 = vld [vmem:[#allocation3 + $0x78] sm:$0xff]
    %v88 = vld [vmem:[%s3] sm:$0xf]
    %vm89 = vcmask 31744
    %v91 = vsel %vm89, %v72, 0
    %v94 = vsel %vm89, %v73, 0
    %v97 = vsel %vm89, %v74, 0
    %v100 = vsel %vm89, %v75, 0
    %v103 = vsel %vm89, %v76, 0
    %v106 = vsel %vm89, %v77, 0
    %v109 = vsel %vm89, %v78, 0
    %v112 = vsel %vm89, %v79, 0
    %v115 = vsel %vm89, %v80, 0
    %v118 = vsel %vm89, %v81, 0
    %v121 = vsel %vm89, %v82, 0
    %v124 = vsel %vm89, %v83, 0
    %v127 = vsel %vm89, %v84, 0
    %v130 = vsel %vm89, %v85, 0
    %v133 = vsel %vm89, %v86, 0
    %v136 = vsel %vm89, %v87, 0
    %vm138 = vcmask 1043456
    %v140 = vsel %vm138, %v88, 0
    %142 = vmatprep.subr.mxu0 0.0
    %143 = vmatpush1.msra.mxu0 0.0
    %144 = vmatprep.subr.mxu0 0.0
    %145 = vmatpush1.msra.mxu0 0.0
    %146 = vmatprep.subr.mxu0 0.0
    %147 = vmatpush1.msra.mxu0 0.0
    %148 = vmatprep.subr.mxu0 0.0
    %149 = vmatpush1.msra.mxu0 0.0
    %150 = vmatprep.subr.mxu0 0.0
    %151 = vmatpush1.msra.mxu0 0.0
    %152 = vmatprep.subr.mxu0 0.0
    %153 = vmatpush1.msra.mxu0 0.0
    %154 = vmatprep.subr.mxu0 0.0
    %155 = vmatpush1.msra.mxu0 0.0
    %156 = vmatprep.subr.mxu0 0.0
    %157 = vmatpush1.msra.mxu0 0.0
    %158 = vmatprep.subr.mxu0 0.0
    %159 = vmatpush1.msra.mxu0 0.0
    %160 = vmatprep.subr.mxu0 0.0
    %161 = vmatpush1.msra.mxu0 0.0
    %162 = vmatprep.subr.mxu0 0.0
    %163 = vmatpush1.msra.mxu0 0.0
    %164 = vmatprep.subr.mxu0 0.0
    %165 = vmatpush1.msra.mxu0 0.0
    %166 = vmatprep.subr.mxu0 0.0
    %167 = vmatpush1.msra.mxu0 0.0
    %168 = vmatprep.subr.mxu0 0.0
    %169 = vmatpush1.msra.mxu0 0.0
    %170 = vmatprep.subr.mxu0 0.0
    %171 = vmatpush1.msra.mxu0 0.0
    %172 = vmatprep.subr.mxu0 0.0
    %173 = vmatpush1.msra.mxu0 %v140
    %174 = vmatprep.subr.mxu0 0.0
    %175 = vmatpush2.msra.mxu0 0.0
    %176 = vmatprep.subr.mxu0 0.0
    %177 = vmatpush2.msra.mxu0 0.0
    %178 = vmatprep.subr.mxu0 0.0
    %179 = vmatpush2.msra.mxu0 0.0
    %180 = vmatprep.subr.mxu0 0.0
    %181 = vmatpush2.msra.mxu0 0.0
    %182 = vmatprep.subr.mxu0 0.0
    %183 = vmatpush2.msra.mxu0 0.0
    %184 = vmatprep.subr.mxu0 0.0
    %185 = vmatpush2.msra.mxu0 0.0
    %186 = vmatprep.subr.mxu0 0.0
    %187 = vmatpush2.msra.mxu0 0.0
    %188 = vmatprep.subr.mxu0 0.0
    %189 = vmatpush2.msra.mxu0 0.0
    %190 = vmatprep.subr.mxu0 0.0
    %191 = vmatpush2.msra.mxu0 0.0
    %192 = vmatprep.subr.mxu0 0.0
    %193 = vmatpush2.msra.mxu0 0.0
    %194 = vmatprep.subr.mxu0 0.0
    %195 = vmatpush2.msra.mxu0 0.0
    %196 = vmatprep.subr.mxu0 0.0
    %197 = vmatpush2.msra.mxu0 0.0
    %198 = vmatprep.subr.mxu0 0.0
    %199 = vmatpush2.msra.mxu0 0.0
    %200 = vmatprep.subr.mxu0 0.0
    %201 = vmatpush2.msra.mxu0 0.0
    %202 = vmatprep.subr.mxu0 0.0
    %203 = vmatpush2.msra.mxu0 0.0
    %204 = vmatprep.subr.mxu0 0.0
    %205 = vmatpush2.msra.mxu0 0.0
    %206 = vmatprep.mubr.f32.mxu0 0.0
    %207 = vmatmul.mubr.f32.gmra.mxu0 %v91
    %v208 = vpop.f32.mrf.mxu0
    %v209 = vadd.f32 0.0, %v208
    %v210 = vpop.f32.mrf.mxu0
    %211 = vmatprep.mubr.f32.mxu0 0.0
    %212 = vmatmul.mubr.f32.gmra.mxu0 %v94
    %v213 = vpop.f32.mrf.mxu0
    %v214 = vadd.f32 0.0, %v213
    %v215 = vpop.f32.mrf.mxu0
    %216 = vmatprep.mubr.f32.mxu0 0.0
    %217 = vmatmul.mubr.f32.gmra.mxu0 %v97
    %v218 = vpop.f32.mrf.mxu0
    %v219 = vadd.f32 0.0, %v218
    %v220 = vpop.f32.mrf.mxu0
    %221 = vmatprep.mubr.f32.mxu0 0.0
    %222 = vmatmul.mubr.f32.gmra.mxu0 %v100
    %v223 = vpop.f32.mrf.mxu0
    %v224 = vadd.f32 0.0, %v223
    %v225 = vpop.f32.mrf.mxu0
    %226 = vmatprep.mubr.f32.mxu0 0.0
    %227 = vmatmul.mubr.f32.gmra.mxu0 %v103
    %v228 = vpop.f32.mrf.mxu0
    %v229 = vadd.f32 0.0, %v228
    %v230 = vpop.f32.mrf.mxu0
    %231 = vmatprep.mubr.f32.mxu0 0.0
    %232 = vmatmul.mubr.f32.gmra.mxu0 %v106
    %v233 = vpop.f32.mrf.mxu0
    %v234 = vadd.f32 0.0, %v233
    %v235 = vpop.f32.mrf.mxu0
    %236 = vmatprep.mubr.f32.mxu0 0.0
    %237 = vmatmul.mubr.f32.gmra.mxu0 %v109
    %v238 = vpop.f32.mrf.mxu0
    %v239 = vadd.f32 0.0, %v238
    %v240 = vpop.f32.mrf.mxu0
    %241 = vmatprep.mubr.f32.mxu0 0.0
    %242 = vmatmul.mubr.f32.gmra.mxu0 %v112
    %v243 = vpop.f32.mrf.mxu0
    %v244 = vadd.f32 0.0, %v243
    %v245 = vpop.f32.mrf.mxu0
    %246 = vmatprep.mubr.f32.mxu0 0.0
    %247 = vmatmul.mubr.f32.gmra.mxu0 %v115
    %v248 = vpop.f32.mrf.mxu0
    %v249 = vadd.f32 0.0, %v248
    %v250 = vpop.f32.mrf.mxu0
    %251 = vmatprep.mubr.f32.mxu0 0.0
    %252 = vmatmul.mubr.f32.gmra.mxu0 %v118
    %v253 = vpop.f32.mrf.mxu0
    %v254 = vadd.f32 0.0, %v253
    %v255 = vpop.f32.mrf.mxu0
    %256 = vmatprep.mubr.f32.mxu0 0.0
    %257 = vmatmul.mubr.f32.gmra.mxu0 %v121
    %v258 = vpop.f32.mrf.mxu0
    %v259 = vadd.f32 0.0, %v258
    %v260 = vpop.f32.mrf.mxu0
    %261 = vmatprep.mubr.f32.mxu0 0.0
    %262 = vmatmul.mubr.f32.gmra.mxu0 %v124
    %v263 = vpop.f32.mrf.mxu0
    %v264 = vadd.f32 0.0, %v263
    %v265 = vpop.f32.mrf.mxu0
    %266 = vmatprep.mubr.f32.mxu0 0.0
    %267 = vmatmul.mubr.f32.gmra.mxu0 %v127
    %v268 = vpop.f32.mrf.mxu0
    %v269 = vadd.f32 0.0, %v268
    %v270 = vpop.f32.mrf.mxu0
    %271 = vmatprep.mubr.f32.mxu0 0.0
    %272 = vmatmul.mubr.f32.gmra.mxu0 %v130
    %v273 = vpop.f32.mrf.mxu0
    %v274 = vadd.f32 0.0, %v273
    %v275 = vpop.f32.mrf.mxu0
    %276 = vmatprep.mubr.f32.mxu0 0.0
    %277 = vmatmul.mubr.f32.gmra.mxu0 %v133
    %v278 = vpop.f32.mrf.mxu0
    %v279 = vadd.f32 0.0, %v278
    %v280 = vpop.f32.mrf.mxu0
    %281 = vmatprep.mubr.f32.mxu0 0.0
    %282 = vmatmul.mubr.f32.gmra.mxu0 %v136
    %v283 = vpop.f32.mrf.mxu0
    %v284 = vadd.f32 0.0, %v283
    %v285 = vpop.f32.mrf.mxu0
    %286 = vdwg.mxu0
    %vm287 = vcmask 64512
    %v289 = vsel %vm287, %v55, 0
    %v292 = vsel %vm287, %v56, 0
    %v295 = vsel %vm287, %v57, 0
    %v298 = vsel %vm287, %v58, 0
    %v301 = vsel %vm287, %v59, 0
    %v304 = vsel %vm287, %v60, 0
    %v307 = vsel %vm287, %v61, 0
    %v310 = vsel %vm287, %v62, 0
    %v313 = vsel %vm287, %v63, 0
    %v316 = vsel %vm287, %v64, 0
    %v319 = vsel %vm287, %v65, 0
    %v322 = vsel %vm287, %v66, 0
    %v325 = vsel %vm287, %v67, 0
    %v328 = vsel %vm287, %v68, 0
    %v331 = vsel %vm287, %v69, 0
    %v334 = vsel %vm287, %v70, 0
    %336 = vmatprep.subr.mxu0 0.0
    %337 = vmatpush1.msra.mxu0 0.0
    %338 = vmatprep.subr.mxu0 0.0
    %339 = vmatpush1.msra.mxu0 0.0
    %340 = vmatprep.subr.mxu0 0.0
    %341 = vmatpush1.msra.mxu0 0.0
    %342 = vmatprep.subr.mxu0 0.0
    %343 = vmatpush1.msra.mxu0 0.0
    %344 = vmatprep.subr.mxu0 0.0
    %345 = vmatpush1.msra.mxu0 0.0
    %346 = vmatprep.subr.mxu0 0.0
    %347 = vmatpush1.msra.mxu0 0.0
    %348 = vmatprep.subr.mxu0 0.0
    %349 = vmatpush1.msra.mxu0 0.0
    %350 = vmatprep.subr.mxu0 0.0
    %351 = vmatpush1.msra.mxu0 0.0
    %352 = vmatprep.subr.mxu0 0.0
    %353 = vmatpush1.msra.mxu0 0.0
    %354 = vmatprep.subr.mxu0 0.0
    %355 = vmatpush1.msra.mxu0 0.0
    %356 = vmatprep.subr.mxu0 0.0
    %357 = vmatpush1.msra.mxu0 0.0
    %358 = vmatprep.subr.mxu0 0.0
    %359 = vmatpush1.msra.mxu0 0.0
    %360 = vmatprep.subr.mxu0 0.0
    %361 = vmatpush1.msra.mxu0 0.0
    %362 = vmatprep.subr.mxu0 0.0
    %363 = vmatpush1.msra.mxu0 0.0
    %364 = vmatprep.subr.mxu0 0.0
    %365 = vmatpush1.msra.mxu0 0.0
    %366 = vmatprep.subr.mxu0 0.0
    %367 = vmatpush1.msra.mxu0 %v71
    %368 = vmatprep.subr.mxu0 0.0
    %369 = vmatpush2.msra.mxu0 0.0
    %370 = vmatprep.subr.mxu0 0.0
    %371 = vmatpush2.msra.mxu0 0.0
    %372 = vmatprep.subr.mxu0 0.0
    %373 = vmatpush2.msra.mxu0 0.0
    %374 = vmatprep.subr.mxu0 0.0
    %375 = vmatpush2.msra.mxu0 0.0
    %376 = vmatprep.subr.mxu0 0.0
    %377 = vmatpush2.msra.mxu0 0.0
    %378 = vmatprep.subr.mxu0 0.0
    %379 = vmatpush2.msra.mxu0 0.0
    %380 = vmatprep.subr.mxu0 0.0
    %381 = vmatpush2.msra.mxu0 0.0
    %382 = vmatprep.subr.mxu0 0.0
    %383 = vmatpush2.msra.mxu0 0.0
    %384 = vmatprep.subr.mxu0 0.0
    %385 = vmatpush2.msra.mxu0 0.0
    %386 = vmatprep.subr.mxu0 0.0
    %387 = vmatpush2.msra.mxu0 0.0
    %388 = vmatprep.subr.mxu0 0.0
    %389 = vmatpush2.msra.mxu0 0.0
    %390 = vmatprep.subr.mxu0 0.0
    %391 = vmatpush2.msra.mxu0 0.0
    %392 = vmatprep.subr.mxu0 0.0
    %393 = vmatpush2.msra.mxu0 0.0
    %394 = vmatprep.subr.mxu0 0.0
    %395 = vmatpush2.msra.mxu0 0.0
    %396 = vmatprep.subr.mxu0 0.0
    %397 = vmatpush2.msra.mxu0 0.0
    %398 = vmatprep.subr.mxu0 0.0
    %399 = vmatpush2.msra.mxu0 0.0
    %400 = vmatprep.mubr.f32.mxu0 0.0
    %401 = vmatmul.mubr.f32.gmra.mxu0 %v289
    %v402 = vpop.f32.mrf.mxu0
    %v403 = vadd.f32 %v209, %v402
    %v404 = vpop.f32.mrf.mxu0
    %405 = vmatprep.mubr.f32.mxu0 0.0
    %406 = vmatmul.mubr.f32.gmra.mxu0 %v292
    %v407 = vpop.f32.mrf.mxu0
    %v408 = vadd.f32 %v214, %v407
    %v409 = vpop.f32.mrf.mxu0
    %410 = vmatprep.mubr.f32.mxu0 0.0
    %411 = vmatmul.mubr.f32.gmra.mxu0 %v295
    %v412 = vpop.f32.mrf.mxu0
    %v413 = vadd.f32 %v219, %v412
    %v414 = vpop.f32.mrf.mxu0
    %415 = vmatprep.mubr.f32.mxu0 0.0
    %416 = vmatmul.mubr.f32.gmra.mxu0 %v298
    %v417 = vpop.f32.mrf.mxu0
    %v418 = vadd.f32 %v224, %v417
    %v419 = vpop.f32.mrf.mxu0
    %420 = vmatprep.mubr.f32.mxu0 0.0
    %421 = vmatmul.mubr.f32.gmra.mxu0 %v301
    %v422 = vpop.f32.mrf.mxu0
    %v423 = vadd.f32 %v229, %v422
    %v424 = vpop.f32.mrf.mxu0
    %425 = vmatprep.mubr.f32.mxu0 0.0
    %426 = vmatmul.mubr.f32.gmra.mxu0 %v304
    %v427 = vpop.f32.mrf.mxu0
    %v428 = vadd.f32 %v234, %v427
    %v429 = vpop.f32.mrf.mxu0
    %430 = vmatprep.mubr.f32.mxu0 0.0
    %431 = vmatmul.mubr.f32.gmra.mxu0 %v307
    %v432 = vpop.f32.mrf.mxu0
    %v433 = vadd.f32 %v239, %v432
    %v434 = vpop.f32.mrf.mxu0
    %435 = vmatprep.mubr.f32.mxu0 0.0
    %436 = vmatmul.mubr.f32.gmra.mxu0 %v310
    %v437 = vpop.f32.mrf.mxu0
    %v438 = vadd.f32 %v244, %v437
    %v439 = vpop.f32.mrf.mxu0
    %440 = vmatprep.mubr.f32.mxu0 0.0
    %441 = vmatmul.mubr.f32.gmra.mxu0 %v313
    %v442 = vpop.f32.mrf.mxu0
    %v443 = vadd.f32 %v249, %v442
    %v444 = vpop.f32.mrf.mxu0
    %445 = vmatprep.mubr.f32.mxu0 0.0
    %446 = vmatmul.mubr.f32.gmra.mxu0 %v316
    %v447 = vpop.f32.mrf.mxu0
    %v448 = vadd.f32 %v254, %v447
    %v449 = vpop.f32.mrf.mxu0
    %450 = vmatprep.mubr.f32.mxu0 0.0
    %451 = vmatmul.mubr.f32.gmra.mxu0 %v319
    %v452 = vpop.f32.mrf.mxu0
    %v453 = vadd.f32 %v259, %v452
    %v454 = vpop.f32.mrf.mxu0
    %455 = vmatprep.mubr.f32.mxu0 0.0
    %456 = vmatmul.mubr.f32.gmra.mxu0 %v322
    %v457 = vpop.f32.mrf.mxu0
    %v458 = vadd.f32 %v264, %v457
    %v459 = vpop.f32.mrf.mxu0
    %460 = vmatprep.mubr.f32.mxu0 0.0
    %461 = vmatmul.mubr.f32.gmra.mxu0 %v325
    %v462 = vpop.f32.mrf.mxu0
    %v463 = vadd.f32 %v269, %v462
    %v464 = vpop.f32.mrf.mxu0
    %465 = vmatprep.mubr.f32.mxu0 0.0
    %466 = vmatmul.mubr.f32.gmra.mxu0 %v328
    %v467 = vpop.f32.mrf.mxu0
    %v468 = vadd.f32 %v274, %v467
    %v469 = vpop.f32.mrf.mxu0
    %470 = vmatprep.mubr.f32.mxu0 0.0
    %471 = vmatmul.mubr.f32.gmra.mxu0 %v331
    %v472 = vpop.f32.mrf.mxu0
    %v473 = vadd.f32 %v279, %v472
    %v474 = vpop.f32.mrf.mxu0
    %475 = vmatprep.mubr.f32.mxu0 0.0
    %476 = vmatmul.mubr.f32.gmra.mxu0 %v334
    %v477 = vpop.f32.mrf.mxu0
    %v478 = vadd.f32 %v284, %v477
    %v479 = vpop.f32.mrf.mxu0
    %480 = vdwg.mxu0
    %v481 = vld [vmem:[%s4] sm:$0x1]
    %v483 = vlaneseq
    %v484 = vshrl.u32 %v483, 7
    %v485 = vsub.s32 0, %v484
    %v486 = vrot.slane %v481, %v485
    %v488 = vadd.f32 %v403, %v486
    %v489 = vadd.f32 %v408, %v486
    %v490 = vadd.f32 %v413, %v486
    %v491 = vadd.f32 %v418, %v486
    %v492 = vadd.f32 %v423, %v486
    %v493 = vadd.f32 %v428, %v486
    %v494 = vadd.f32 %v433, %v486
    %v495 = vadd.f32 %v438, %v486
    %v496 = vadd.f32 %v443, %v486
    %v497 = vadd.f32 %v448, %v486
    %v498 = vadd.f32 %v453, %v486
    %v499 = vadd.f32 %v458, %v486
    %v500 = vadd.f32 %v463, %v486
    %v501 = vadd.f32 %v468, %v486
    %v502 = vadd.f32 %v473, %v486
    %v503 = vadd.f32 %v478, %v486
    %v504 = vmax.f32 %v488, 0.0
    %v505 = vmax.f32 %v489, 0.0
    %v506 = vmax.f32 %v490, 0.0
    %v507 = vmax.f32 %v491, 0.0
    %v508 = vmax.f32 %v492, 0.0
    %v509 = vmax.f32 %v493, 0.0
    %v510 = vmax.f32 %v494, 0.0
    %v511 = vmax.f32 %v495, 0.0
    %v512 = vmax.f32 %v496, 0.0
    %v513 = vmax.f32 %v497, 0.0
    %v514 = vmax.f32 %v498, 0.0
    %v515 = vmax.f32 %v499, 0.0
    %v516 = vmax.f32 %v500, 0.0
    %v517 = vmax.f32 %v501, 0.0
    %v518 = vmax.f32 %v502, 0.0
    %v519 = vmax.f32 %v503, 0.0
    %v520 = vld [vmem:[%s5] sm:$0x1]
    %v521 = vld [vmem:[#allocation2] sm:$0x1]
    %523 = vset.pattern.permute.xlu0 0
    %524 = vperm.xlu0 %523, %v521
    %v525 = vpop.permute.xlu0 %524
    %v527 = vlaneseq
    %v528 = vshrl.u32 %v527, 7
    %v529 = vsub.s32 0, %v528
    %v530 = vrot.slane %v525, %v529
    %vm531 = vcmask 244736
    %v533 = vsel %vm531, %v520, 0
    %v536 = vsel %vm531, %v504, 0
    %v539 = vsel %vm531, %v505, 0
    %v542 = vsel %vm531, %v506, 0
    %v545 = vsel %vm531, %v507, 0
    %v548 = vsel %vm531, %v508, 0
    %v551 = vsel %vm531, %v509, 0
    %v554 = vsel %vm531, %v510, 0
    %v557 = vsel %vm531, %v511, 0
    %v560 = vsel %vm531, %v512, 0
    %v563 = vsel %vm531, %v513, 0
    %v566 = vsel %vm531, %v514, 0
    %v569 = vsel %vm531, %v515, 0
    %v572 = vsel %vm531, %v516, 0
    %v575 = vsel %vm531, %v517, 0
    %v578 = vsel %vm531, %v518, 0
    %v581 = vsel %vm531, %v519, 0
    %583 = vmatprep.subr.mxu0 0.0
    %584 = vmatpush1.xpose.msra.mxu0 %v581
    %585 = vmatprep.subr.mxu0 0.0
    %586 = vmatpush1.xpose.msra.mxu0 %v578
    %587 = vmatprep.subr.mxu0 0.0
    %588 = vmatpush1.xpose.msra.mxu0 %v575
    %589 = vmatprep.subr.mxu0 0.0
    %590 = vmatpush1.xpose.msra.mxu0 %v572
    %591 = vmatprep.subr.mxu0 0.0
    %592 = vmatpush1.xpose.msra.mxu0 %v569
    %593 = vmatprep.subr.mxu0 0.0
    %594 = vmatpush1.xpose.msra.mxu0 %v566
    %595 = vmatprep.subr.mxu0 0.0
    %596 = vmatpush1.xpose.msra.mxu0 %v563
    %597 = vmatprep.subr.mxu0 0.0
    %598 = vmatpush1.xpose.msra.mxu0 %v560
    %599 = vmatprep.subr.mxu0 0.0
    %600 = vmatpush1.xpose.msra.mxu0 %v557
    %601 = vmatprep.subr.mxu0 0.0
    %602 = vmatpush1.xpose.msra.mxu0 %v554
    %603 = vmatprep.subr.mxu0 0.0
    %604 = vmatpush1.xpose.msra.mxu0 %v551
    %605 = vmatprep.subr.mxu0 0.0
    %606 = vmatpush1.xpose.msra.mxu0 %v548
    %607 = vmatprep.subr.mxu0 0.0
    %608 = vmatpush1.xpose.msra.mxu0 %v545
    %609 = vmatprep.subr.mxu0 0.0
    %610 = vmatpush1.xpose.msra.mxu0 %v542
    %611 = vmatprep.subr.mxu0 0.0
    %612 = vmatpush1.xpose.msra.mxu0 %v539
    %613 = vmatprep.subr.mxu0 0.0
    %614 = vmatpush1.xpose.msra.mxu0 %v536
    %615 = vmatprep.subr.mxu0 0.0
    %616 = vmatpush2.xpose.msra.mxu0 0.0
    %617 = vmatprep.subr.mxu0 0.0
    %618 = vmatpush2.xpose.msra.mxu0 0.0
    %619 = vmatprep.subr.mxu0 0.0
    %620 = vmatpush2.xpose.msra.mxu0 0.0
    %621 = vmatprep.subr.mxu0 0.0
    %622 = vmatpush2.xpose.msra.mxu0 0.0
    %623 = vmatprep.subr.mxu0 0.0
    %624 = vmatpush2.xpose.msra.mxu0 0.0
    %625 = vmatprep.subr.mxu0 0.0
    %626 = vmatpush2.xpose.msra.mxu0 0.0
    %627 = vmatprep.subr.mxu0 0.0
    %628 = vmatpush2.xpose.msra.mxu0 0.0
    %629 = vmatprep.subr.mxu0 0.0
    %630 = vmatpush2.xpose.msra.mxu0 0.0
    %631 = vmatprep.subr.mxu0 0.0
    %632 = vmatpush2.xpose.msra.mxu0 0.0
    %633 = vmatprep.subr.mxu0 0.0
    %634 = vmatpush2.xpose.msra.mxu0 0.0
    %635 = vmatprep.subr.mxu0 0.0
    %636 = vmatpush2.xpose.msra.mxu0 0.0
    %637 = vmatprep.subr.mxu0 0.0
    %638 = vmatpush2.xpose.msra.mxu0 0.0
    %639 = vmatprep.subr.mxu0 0.0
    %640 = vmatpush2.xpose.msra.mxu0 0.0
    %641 = vmatprep.subr.mxu0 0.0
    %642 = vmatpush2.xpose.msra.mxu0 0.0
    %643 = vmatprep.subr.mxu0 0.0
    %644 = vmatpush2.xpose.msra.mxu0 0.0
    %645 = vmatprep.subr.mxu0 0.0
    %646 = vmatpush2.xpose.msra.mxu0 0.0
    %647 = vmatprep.mubr.f32.mxu0 0.0
    %648 = vmatmul.mubr.f32.gmra.mxu0 %v533
    %v649 = vpop.f32.mrf.mxu0
    %v650 = vadd.f32 %v530, %v649
    %v651 = vpop.f32.mrf.mxu0
    %652 = vdwg.mxu0
    %653 = vst [vmem:[#allocation8] sm:$0x1] %v650
    // Predicated region
    $region38: #{tpu_custom_call.1} parent=1 // pred_check
      _
    $region39: #{tpu_custom_call.1} parent=1 // pred_check_branch
      %655 = sbr.rel (0) target = $region41
    $region40: #{tpu_custom_call.1} parent=1 // pred_region
      %s657 = ssub.s32 16, 16
      %658 = vsyncadd [#allocation5], %s657
      %s660 = sshll.u32 [#allocation8], 4
      %s661 = int_to_ptr.vmem [resolvable:$true] %s660
      %663 = dma.vmem_to_hbm [thread:$0]  %s661, 16, %s7, [#allocation5]
    $region41: #{tpu_custom_call.1} parent=1 // pred_fallthru
      _
    // Predicated region
    $region42: #{tpu_custom_call.1} parent=1 // pred_check
      _
    $region43: #{tpu_custom_call.1} parent=1 // pred_check_branch
      %665 = sbr.rel (0) target = $region45
    $region44: #{tpu_custom_call.1} parent=1 // pred_region
      %666 = dma.done [#allocation5], 16
    $region45: #{tpu_custom_call.1} parent=1 // pred_fallthru
      _
    %667 = vsyncpa [#allocation4], 1
    %668 = vsyncpa [#allocation7], 1
    %669 = vsyncpa [#allocation5], 1

</llo_original>
